<compile_context>
chip_gen: v7x
topology: tpu7x:2x2x1
jax: 0.10.0
libtpu: 0.0.40
codegen_flags: <defaults>
</compile_context>

<pallas_src>
import functools

import jax
import jax.numpy as jnp
from jax.experimental import pallas as pl
from jax.experimental.pallas import tpu as pltpu

_LANE = 128
# 2048 rows * 128 lanes * 4 B = 1 MiB per f32 block; with x, bits and out each
# double-buffered that is ~6 MiB of VMEM — comfortably inside the 16/32 MiB
# default scoped VMEM on v5e/v6e/v7x while amortizing per-step pipeline overhead.
_MAX_TILE_ROWS = 2048


def _unreg_dropout_kernel(x_ref, bits_ref, o_ref, *, threshold: int):
    # keep iff uniform-32-bit value < keep_prob * 2^32  (one compare + one select).
    keep = bits_ref[...] < jnp.uint32(threshold)
    o_ref[...] = jnp.where(keep, x_ref[...], jnp.zeros_like(x_ref[...]))


def unreg_dropout(x, p: float = 0.5, *, training: bool = True, key=None):
    """Forward pass of UnregDropout (no 1/keep_prob rescaling). x: any shape/float dtype."""
    if p < 0 or p > 1:
        raise ValueError(f"dropout probability has to be between 0 and 1, but got {p}")
    if not training or p == 0.0:
        return x
    if p == 1.0:
        return jnp.zeros_like(x)

    keep_prob = 1.0 - p
    threshold = min(int(round(keep_prob * (1 << 32))), (1 << 32) - 1)

    if key is None:
        key = jax.random.PRNGKey(0)

    orig_shape = x.shape
    flat = x.reshape(-1)
    n = flat.shape[0]

    # Only pad up to the 128-lane boundary; fully-aligned inputs take the no-copy path.
    pad = (-n) % _LANE
    if pad:
        flat = jnp.pad(flat, (0, pad))
    rows = flat.shape[0] // _LANE
    x2d = flat.reshape(rows, _LANE)

    # Independent random bits for every element (generated on-device by XLA).
    bits = jax.random.bits(key, (rows, _LANE), dtype=jnp.uint32)

    # Tile rows: full array when small, otherwise ~1 MiB blocks (multiple of 8 sublanes).
    tile_rows = rows if rows <= _MAX_TILE_ROWS else _MAX_TILE_ROWS
    grid = (pl.cdiv(rows, tile_rows),)

    kernel = functools.partial(_unreg_dropout_kernel, threshold=threshold)

    out2d = pl.pallas_call(
        kernel,
        out_shape=jax.ShapeDtypeStruct((rows, _LANE), x.dtype),
        grid=grid,
        in_specs=[
            pl.BlockSpec((tile_rows, _LANE), lambda i: (i, 0)),
            pl.BlockSpec((tile_rows, _LANE), lambda i: (i, 0)),
        ],
        out_specs=pl.BlockSpec((tile_rows, _LANE), lambda i: (i, 0)),
        compiler_params=pltpu.CompilerParams(
            dimension_semantics=("parallel",)
        ),
    )(x2d, bits)

    if pad:
        return out2d.reshape(-1)[:n].reshape(orig_shape)
    return out2d.reshape(orig_shape)


if __name__ == "__main__":
    key = jax.random.PRNGKey(0)
    data_key, mask_key = jax.random.split(key)

    # Shape consistent with an NCHW activation the module would see.
    x = jax.random.normal(data_key, (2, 4, 16, 16), dtype=jnp.float32)

    y = unreg_dropout(x, p=0.5, training=True, key=mask_key)
    y = jax.block_until_ready(y)

    # Sanity checks: shape/dtype preserved, entries are either 0 or exactly the input
    # (un-rescaled dropout), and the mask is non-trivial.
    assert y.shape == x.shape and y.dtype == x.dtype
    zero_or_same = jnp.logical_or(y == 0, y == x)
    assert bool(jnp.all(zero_or_same))
    assert bool(jnp.any(y == 0)) and bool(jnp.any(y == x))

    # Degenerate / eval-mode paths are identity or zeros.
    y_eval = jax.block_until_ready(unreg_dropout(x, p=0.5, training=False))
    assert bool(jnp.all(y_eval == x))
    y_p0 = jax.block_until_ready(unreg_dropout(x, p=0.0, training=True, key=mask_key))
    assert bool(jnp.all(y_p0 == x))
    y_p1 = jax.block_until_ready(unreg_dropout(x, p=1.0, training=True, key=mask_key))
    assert bool(jnp.all(y_p1 == 0))

    print("KERNEL_OK")
</pallas_src>

<mosaic_0001>
module attributes {stable_mosaic.version = 11 : i64} {
  func.func @_unreg_dropout_kernel(%arg0: i32, %arg1: memref<16x128xf32, #tpu.memory_space<vmem>>, %arg2: memref<16x128xi32, #tpu.memory_space<vmem>>, %arg3: memref<16x128xf32, #tpu.memory_space<vmem>>) attributes {dimension_semantics = [#tpu.dimension_semantics<parallel>], iteration_bounds = array<i64: 1>, scalar_prefetch = 0 : i64, scratch_operands = 0 : i64, tpu.core_type = #tpu.core_type<tc>, window_params = [{transform_indices = @transform_0, window_bounds = array<i64: 16, 128>}, {transform_indices = @transform_1, window_bounds = array<i64: 16, 128>}, {transform_indices = @transform_2, window_bounds = array<i64: 16, 128>}]} {
    %c0 = arith.constant 0 : index
    %c0_0 = arith.constant 0 : index
    %0 = vector.load %arg2[%c0, %c0_0] : memref<16x128xi32, #tpu.memory_space<vmem>>, vector<16x128xi32>
    %c-2147483648_i32 = arith.constant -2147483648 : i32
    %1 = vector.broadcast %c-2147483648_i32 : i32 to vector<16x128xi32>
    %2 = arith.cmpi ult, %0, %1 : vector<16x128xi32>
    %c0_1 = arith.constant 0 : index
    %c0_2 = arith.constant 0 : index
    %3 = vector.load %arg1[%c0_1, %c0_2] : memref<16x128xf32, #tpu.memory_space<vmem>>, vector<16x128xf32>
    %cst = arith.constant 0.000000e+00 : f32
    %4 = vector.broadcast %cst : f32 to vector<16x128xf32>
    %5 = arith.select %2, %3, %4 : vector<16x128xi1>, vector<16x128xf32>
    %c0_3 = arith.constant 0 : index
    %c0_4 = arith.constant 0 : index
    %6 = vector.load %arg3[%c0_3, %c0_4] : memref<16x128xf32, #tpu.memory_space<vmem>>, vector<16x128xf32>
    tpu.vector_store %arg3[%c0_3, %c0_4], %5 {strides = array<i32>} : memref<16x128xf32, #tpu.memory_space<vmem>>, vector<16x128xf32>,
    return
  }
  func.func @transform_0(%arg0: i32) -> (i32, i32) {
    %c0_i32 = arith.constant 0 : i32
    %c0_i32_0 = arith.constant 0 : i32
    return %arg0, %c0_i32 : i32, i32
  }
  func.func @transform_1(%arg0: i32) -> (i32, i32) {
    %c0_i32 = arith.constant 0 : i32
    %c0_i32_0 = arith.constant 0 : i32
    return %arg0, %c0_i32 : i32, i32
  }
  func.func @transform_2(%arg0: i32) -> (i32, i32) {
    %c0_i32 = arith.constant 0 : i32
    %c0_i32_0 = arith.constant 0 : i32
    return %arg0, %c0_i32 : i32, i32
  }
}

</mosaic_0001>

<llo_original>
// kernel: tpu_custom_call.1
$region0: #{tpu_custom_call.1}
  #allocation0 [shape = 'u32[]', space=smem, size = 0x4, offset = 0x4, fixed_abs, tag = 'smem constant byte address 0x4 - core index']
  #allocation1 [shape = 'u32[144,128]{1,0:T(1,128)}', space=vmem, size = 0x12000, scoped, tag = 'internal scratch']
  %s0 = inlined_call_operand.hbm [shape: f32[16,128], index: 0, kind: input, shape index: {}]
  %s1 = inlined_call_operand.hbm [shape: u32[16,128], index: 1, kind: input, shape index: {}]
  %s2 = inlined_call_operand.hbm [shape: f32[16,128], index: 2, kind: output, shape index: {}]
  %s3 = sld [smem:[#allocation0]]
  $region26: #{tpu_custom_call.1} parent=0
    _
  %s5 = ssub.s32 1, %s3
  %s6 = scalar_select 0, %s5, %s3
  $region1: #{tpu_custom_call.1} parent=0
    #allocation2 [shape = 'u8[8192]{0}', space=vmem, size = 0x2000, scoped, tag = 'input window, operand 0, single buffered']
    #allocation3 [shape = 's32[1]{0}', space=sflag, size = 0x4, scoped, tag = 'scoped memory for tpu_custom_call.1']
    #allocation4 [shape = 's32[1]{0}', space=sflag, size = 0x4, scoped, tag = 'scoped memory for tpu_custom_call.1']
    #allocation5 [shape = 'u8[8192]{0}', space=vmem, size = 0x2000, scoped, tag = 'input window, operand 1, single buffered']
    #allocation6 [shape = 's32[1]{0}', space=sflag, size = 0x4, scoped, tag = 'scoped memory for tpu_custom_call.1']
    #allocation7 [shape = 'u8[8192]{0}', space=vmem, size = 0x2000, scoped, tag = 'output window, operand 0, single buffered']
    %7 = vsyncpa [#allocation3], 0
    %8 = vsyncpa [#allocation6], 0
    %9 = vsyncpa [#allocation4], 0
    // Predicated region
    $region2: #{tpu_custom_call.1} parent=1 // pred_check
      _
    $region3: #{tpu_custom_call.1} parent=1 // pred_check_branch
      %11 = sbr.rel (0) target = $region5
    $region4: #{tpu_custom_call.1} parent=1 // pred_region
      %s13 = ssub.s32 256, 256
      %14 = vsyncadd [#allocation3], %s13
      %s15 = sshll.u32 [#allocation2], 4
      %s16 = int_to_ptr.vmem [resolvable:$true] %s15
      %21 = dma.hbm_to_vmem [thread:$0]  %s0, 256, %s16, [#allocation3], 128, 128, 8
    $region5: #{tpu_custom_call.1} parent=1 // pred_fallthru
      _
    // Predicated region
    $region6: #{tpu_custom_call.1} parent=1 // pred_check
      _
    $region7: #{tpu_custom_call.1} parent=1 // pred_check_branch
      %23 = sbr.rel (0) target = $region9
    $region8: #{tpu_custom_call.1} parent=1 // pred_region
      %s25 = ssub.s32 256, 256
      %26 = vsyncadd [#allocation6], %s25
      %s27 = sshll.u32 [#allocation5], 4
      %s28 = int_to_ptr.vmem [resolvable:$true] %s27
      %33 = dma.hbm_to_vmem [thread:$0]  %s1, 256, %s28, [#allocation6], 128, 128, 8
    $region9: #{tpu_custom_call.1} parent=1 // pred_fallthru
      _
    // Predicated region
    $region10: #{tpu_custom_call.1} parent=1 // pred_check
      _
    $region11: #{tpu_custom_call.1} parent=1 // pred_check_branch
      %35 = sbr.rel (0) target = $region13
    $region12: #{tpu_custom_call.1} parent=1 // pred_region
      %36 = dma.done [#allocation3], 256
    $region13: #{tpu_custom_call.1} parent=1 // pred_fallthru
      _
    // Predicated region
    $region14: #{tpu_custom_call.1} parent=1 // pred_check
      _
    $region15: #{tpu_custom_call.1} parent=1 // pred_check_branch
      %38 = sbr.rel (0) target = $region17
    $region16: #{tpu_custom_call.1} parent=1 // pred_region
      %39 = dma.done [#allocation6], 256
    $region17: #{tpu_custom_call.1} parent=1 // pred_fallthru
      _
    %v40 = vld [vmem:[#allocation5] sm:$0xff]
    %v41 = vld [vmem:[#allocation5 + $0x8] sm:$0xff]
    %vm42 = vcmp.lt.u32.totalorder %v40, 2147483648
    %vm43 = vcmp.lt.u32.totalorder %v41, 2147483648
    %v44 = vld [vmem:[#allocation2] sm:$0xff]
    %v45 = vld [vmem:[#allocation2 + $0x8] sm:$0xff]
    %v46 = vsel %vm42, %v44, 0.0
    %v47 = vsel %vm43, %v45, 0.0
    %48 = vst [vmem:[#allocation7] sm:$0xff] %v46
    %49 = vst [vmem:[#allocation7 + $0x8] sm:$0xff] %v47
    // Predicated region
    $region18: #{tpu_custom_call.1} parent=1 // pred_check
      _
    $region19: #{tpu_custom_call.1} parent=1 // pred_check_branch
      %51 = sbr.rel (0) target = $region21
    $region20: #{tpu_custom_call.1} parent=1 // pred_region
      %s53 = ssub.s32 256, 256
      %54 = vsyncadd [#allocation4], %s53
      %s55 = sshll.u32 [#allocation7], 4
      %s56 = int_to_ptr.vmem [resolvable:$true] %s55
      %61 = dma.vmem_to_hbm [thread:$0]  %s56, 256, %s2, [#allocation4], 128, 128, 8
    $region21: #{tpu_custom_call.1} parent=1 // pred_fallthru
      _
    // Predicated region
    $region22: #{tpu_custom_call.1} parent=1 // pred_check
      _
    $region23: #{tpu_custom_call.1} parent=1 // pred_check_branch
      %63 = sbr.rel (0) target = $region25
    $region24: #{tpu_custom_call.1} parent=1 // pred_region
      %64 = dma.done [#allocation4], 256
    $region25: #{tpu_custom_call.1} parent=1 // pred_fallthru
      _
    %65 = vsyncpa [#allocation3], 1
    %66 = vsyncpa [#allocation6], 1
    %67 = vsyncpa [#allocation4], 1

</llo_original>
